<compile_context>
chip_gen: v6e
topology: v6e:2x2x1
jax: 0.10.0
libtpu: 0.0.40
codegen_flags: <defaults>
</compile_context>

<pallas_src>
import functools
import math

import jax
import jax.numpy as jnp
from jax.experimental import pallas as pl
from jax.experimental.pallas import tpu as pltpu


# ---------------------------------------------------------------------------
# Tile selection helper: largest aligned divisor, else full extent (legal).
# ---------------------------------------------------------------------------
def _pick_tile(n, candidates):
    for c in candidates:
        if n % c == 0:
            return c
    return n


# ---------------------------------------------------------------------------
# Tiled matmul kernel (wq / wk / wv / wo projections).
# ---------------------------------------------------------------------------
def _matmul_kernel(a_ref, b_ref, o_ref, acc_ref):
    @pl.when(pl.program_id(2) == 0)
    def _():
        acc_ref[...] = jnp.zeros_like(acc_ref)

    acc_ref[...] += jnp.dot(a_ref[...], b_ref[...],
                            preferred_element_type=jnp.float32)

    @pl.when(pl.program_id(2) == pl.num_programs(2) - 1)
    def _():
        o_ref[...] = acc_ref[...].astype(o_ref.dtype)


def matmul(a, b):
    """a: (M, K), b: (K, N) -> (M, N)."""
    M, K = a.shape
    K2, N = b.shape
    assert K == K2
    tm = _pick_tile(M, (512, 256, 128, 64, 32, 16, 8))
    tn = _pick_tile(N, (256, 128))
    tk = _pick_tile(K, (512, 256, 128))
    grid = (pl.cdiv(M, tm), pl.cdiv(N, tn), pl.cdiv(K, tk))
    out_dtype = jnp.result_type(a.dtype, b.dtype)

    return pl.pallas_call(
        _matmul_kernel,
        out_shape=jax.ShapeDtypeStruct((M, N), out_dtype),
        grid_spec=pltpu.PrefetchScalarGridSpec(
            num_scalar_prefetch=0,
            grid=grid,
            in_specs=[
                pl.BlockSpec((tm, tk), lambda i, j, k: (i, k)),
                pl.BlockSpec((tk, tn), lambda i, j, k: (k, j)),
            ],
            out_specs=pl.BlockSpec((tm, tn), lambda i, j, k: (i, j)),
            scratch_shapes=[pltpu.VMEM((tm, tn), jnp.float32)],
        ),
        compiler_params=pltpu.CompilerParams(
            dimension_semantics=("parallel", "parallel", "arbitrary"),
        ),
    )(a, b)


# ---------------------------------------------------------------------------
# Flash-attention kernel (non-causal, no mask, no dropout).
# ---------------------------------------------------------------------------
def _attn_kernel(q_ref, k_ref, v_ref, o_ref, m_sc, l_sc, acc_sc, *, scale):
    ki = pl.program_id(2)

    @pl.when(ki == 0)
    def _():
        m_sc[...] = jnp.full_like(m_sc, -jnp.inf)
        l_sc[...] = jnp.zeros_like(l_sc)
        acc_sc[...] = jnp.zeros_like(acc_sc)

    q = q_ref[...].astype(jnp.float32)
    k = k_ref[...].astype(jnp.float32)
    s = jnp.einsum('bqd,bkd->bqk', q, k,
                   preferred_element_type=jnp.float32) * scale

    m_prev = m_sc[...]
    m_new = jnp.maximum(m_prev, s.max(axis=-1, keepdims=True))
    alpha = jnp.exp(m_prev - m_new)
    p = jnp.exp(s - m_new)
    l_sc[...] = alpha * l_sc[...] + p.sum(axis=-1, keepdims=True)
    acc_sc[...] = alpha * acc_sc[...] + jnp.einsum(
        'bqk,bkd->bqd', p, v_ref[...].astype(jnp.float32),
        preferred_element_type=jnp.float32)
    m_sc[...] = m_new

    @pl.when(ki == pl.num_programs(2) - 1)
    def _():
        o_ref[...] = (acc_sc[...] / l_sc[...]).astype(o_ref.dtype)


def flash_attention(q, k, v, scale):
    """q, k, v: (BH, S, D) -> (BH, S, D)."""
    BH, S, D = q.shape
    tq = _pick_tile(S, (512, 256, 128, 64, 32, 16, 8))
    tk = _pick_tile(S, (512, 256, 128, 64, 32, 16, 8))
    grid = (BH, pl.cdiv(S, tq), pl.cdiv(S, tk))
    kernel = functools.partial(_attn_kernel, scale=scale)

    return pl.pallas_call(
        kernel,
        out_shape=jax.ShapeDtypeStruct((BH, S, D), q.dtype),
        grid_spec=pltpu.PrefetchScalarGridSpec(
            num_scalar_prefetch=0,
            grid=grid,
            in_specs=[
                pl.BlockSpec((1, tq, D), lambda b, qi, ki: (b, qi, 0)),
                pl.BlockSpec((1, tk, D), lambda b, qi, ki: (b, ki, 0)),
                pl.BlockSpec((1, tk, D), lambda b, qi, ki: (b, ki, 0)),
            ],
            out_specs=pl.BlockSpec((1, tq, D), lambda b, qi, ki: (b, qi, 0)),
            scratch_shapes=[
                pltpu.VMEM((1, tq, 1), jnp.float32),   # running max
                pltpu.VMEM((1, tq, 1), jnp.float32),   # running denom
                pltpu.VMEM((1, tq, D), jnp.float32),   # running numerator
            ],
        ),
        compiler_params=pltpu.CompilerParams(
            dimension_semantics=("parallel", "parallel", "arbitrary"),
        ),
    )(q, k, v)


# ---------------------------------------------------------------------------
# Full Attention.forward (inference): projections + SDPA + output projection.
# ---------------------------------------------------------------------------
def attention_forward(x, wq, wk, wv, wo, n_heads):
    bsz, seqlen, dim = x.shape
    assert dim % n_heads == 0
    head_dim = dim // n_heads

    x2d = x.reshape(bsz * seqlen, dim)
    # torch nn.Linear: y = x @ W.T  (W stored as (out_features, in_features))
    xq = matmul(x2d, wq.T)
    xk = matmul(x2d, wk.T)
    xv = matmul(x2d, wv.T)

    def split_heads(t):
        return (t.reshape(bsz, seqlen, n_heads, head_dim)
                 .transpose(0, 2, 1, 3)
                 .reshape(bsz * n_heads, seqlen, head_dim))

    q = split_heads(xq)
    k = split_heads(xk)
    v = split_heads(xv)

    o = flash_attention(q, k, v, scale=1.0 / math.sqrt(head_dim))

    o = (o.reshape(bsz, n_heads, seqlen, head_dim)
          .transpose(0, 2, 1, 3)
          .reshape(bsz * seqlen, dim))
    out = matmul(o, wo.T)
    # TODO(synk): attn_dropout / resid_dropout are train-mode only (identity here).
    return out.reshape(bsz, seqlen, dim)


# ---------------------------------------------------------------------------
# Pure-JAX reference (matches the torch "slow attention" path with dropout=0).
# ---------------------------------------------------------------------------
def attention_ref(x, wq, wk, wv, wo, n_heads):
    bsz, seqlen, dim = x.shape
    head_dim = dim // n_heads
    xq = x @ wq.T
    xk = x @ wk.T
    xv = x @ wv.T

    def sh(t):
        return t.reshape(bsz, seqlen, n_heads, head_dim).transpose(0, 2, 1, 3)

    q, k, v = sh(xq), sh(xk), sh(xv)
    scores = jnp.einsum('bhqd,bhkd->bhqk', q, k) / math.sqrt(head_dim)
    p = jax.nn.softmax(scores.astype(jnp.float32), axis=-1).astype(q.dtype)
    o = jnp.einsum('bhqk,bhkd->bhqd', p, v)
    o = o.transpose(0, 2, 1, 3).reshape(bsz, seqlen, dim)
    return o @ wo.T


if __name__ == "__main__":
    key = jax.random.PRNGKey(0)
    bsz, seqlen, dim, n_heads = 2, 8, 32, 4

    k0, k1, k2, k3, k4 = jax.random.split(key, 5)
    scale = 1.0 / math.sqrt(dim)
    x = jax.random.normal(k0, (bsz, seqlen, dim), dtype=jnp.float32)
    wq = jax.random.uniform(k1, (dim, dim), jnp.float32, -scale, scale)
    wk = jax.random.uniform(k2, (dim, dim), jnp.float32, -scale, scale)
    wv = jax.random.uniform(k3, (dim, dim), jnp.float32, -scale, scale)
    wo = jax.random.uniform(k4, (dim, dim), jnp.float32, -scale, scale)

    out = attention_forward(x, wq, wk, wv, wo, n_heads)
    out = jax.block_until_ready(out)

    ref = attention_ref(x, wq, wk, wv, wo, n_heads)
    assert out.shape == (bsz, seqlen, dim)
    assert jnp.allclose(out, ref, atol=1e-4, rtol=1e-4), float(jnp.max(jnp.abs(out - ref)))

    print("KERNEL_OK")
</pallas_src>

<mosaic_0001>
module attributes {stable_mosaic.version = 11 : i64} {
  func.func @_matmul_kernel(%arg0: i32, %arg1: i32, %arg2: i32, %arg3: memref<16x32xf32, #tpu.memory_space<vmem>>, %arg4: memref<32x32xf32, #tpu.memory_space<vmem>>, %arg5: memref<16x32xf32, #tpu.memory_space<vmem>>, %arg6: memref<16x32xf32, #tpu.memory_space<vmem>>) attributes {dimension_semantics = [#tpu.dimension_semantics<parallel>, #tpu.dimension_semantics<parallel>, #tpu.dimension_semantics<arbitrary>], iteration_bounds = array<i64: 1, 1, 1>, scalar_prefetch = 0 : i64, scratch_operands = 1 : i64, tpu.core_type = #tpu.core_type<tc>, window_params = [{transform_indices = @transform_0, window_bounds = array<i64: 16, 32>}, {transform_indices = @transform_1, window_bounds = array<i64: 32, 32>}, {transform_indices = @transform_2, window_bounds = array<i64: 16, 32>}]} {
    %c0_i32 = arith.constant 0 : i32
    %0 = arith.cmpi eq, %arg2, %c0_i32 : i32
    %1 = arith.extui %0 : i1 to i32
    %c0_i32_0 = arith.constant 0 : i32
    %2 = arith.cmpi ne, %1, %c0_i32_0 : i32
    scf.if %2 {
      %cst_10 = arith.constant 0.000000e+00 : f32
      %12 = vector.broadcast %cst_10 : f32 to vector<16x32xf32>
      %c0_11 = arith.constant 0 : index
      %c0_12 = arith.constant 0 : index
      %13 = vector.load %arg6[%c0_11, %c0_12] : memref<16x32xf32, #tpu.memory_space<vmem>>, vector<16x32xf32>
      tpu.vector_store %arg6[%c0_11, %c0_12], %12 {strides = array<i32>} : memref<16x32xf32, #tpu.memory_space<vmem>>, vector<16x32xf32>,
    } else {
    }
    %c0 = arith.constant 0 : index
    %c0_1 = arith.constant 0 : index
    %3 = vector.load %arg6[%c0, %c0_1] : memref<16x32xf32, #tpu.memory_space<vmem>>, vector<16x32xf32>
    %c0_2 = arith.constant 0 : index
    %c0_3 = arith.constant 0 : index
    %4 = vector.load %arg3[%c0_2, %c0_3] : memref<16x32xf32, #tpu.memory_space<vmem>>, vector<16x32xf32>
    %c0_4 = arith.constant 0 : index
    %c0_5 = arith.constant 0 : index
    %5 = vector.load %arg4[%c0_4, %c0_5] : memref<32x32xf32, #tpu.memory_space<vmem>>, vector<32x32xf32>
    %cst = arith.constant dense<0.000000e+00> : vector<16x32xf32>
    %6 = tpu.matmul %4, %5, %cst {dimension_numbers = #tpu.dot_dimension_numbers<[1], [0], [0], [1], [0, 0, 1, 1], [], []>} : vector<16x32xf32>, vector<32x32xf32>, vector<16x32xf32> -> vector<16x32xf32>
    %7 = arith.addf %3, %6 : vector<16x32xf32>
    %c0_6 = arith.constant 0 : index
    %c0_7 = arith.constant 0 : index
    %8 = vector.load %arg6[%c0_6, %c0_7] : memref<16x32xf32, #tpu.memory_space<vmem>>, vector<16x32xf32>
    tpu.vector_store %arg6[%c0_6, %c0_7], %7 {strides = array<i32>} : memref<16x32xf32, #tpu.memory_space<vmem>>, vector<16x32xf32>,
    %c0_i32_8 = arith.constant 0 : i32
    %9 = arith.cmpi eq, %arg2, %c0_i32_8 : i32
    %10 = arith.extui %9 : i1 to i32
    %c0_i32_9 = arith.constant 0 : i32
    %11 = arith.cmpi ne, %10, %c0_i32_9 : i32
    scf.if %11 {
      %c0_10 = arith.constant 0 : index
      %c0_11 = arith.constant 0 : index
      %12 = vector.load %arg6[%c0_10, %c0_11] : memref<16x32xf32, #tpu.memory_space<vmem>>, vector<16x32xf32>
      %c0_12 = arith.constant 0 : index
      %c0_13 = arith.constant 0 : index
      %13 = vector.load %arg5[%c0_12, %c0_13] : memref<16x32xf32, #tpu.memory_space<vmem>>, vector<16x32xf32>
      tpu.vector_store %arg5[%c0_12, %c0_13], %12 {strides = array<i32>} : memref<16x32xf32, #tpu.memory_space<vmem>>, vector<16x32xf32>,
    } else {
    }
    return
  }
  func.func @transform_0(%arg0: i32, %arg1: i32, %arg2: i32) -> (i32, i32) {
    %c0_i32 = arith.constant 0 : i32
    return %arg0, %arg2 : i32, i32
  }
  func.func @transform_1(%arg0: i32, %arg1: i32, %arg2: i32) -> (i32, i32) {
    %c0_i32 = arith.constant 0 : i32
    return %arg2, %arg1 : i32, i32
  }
  func.func @transform_2(%arg0: i32, %arg1: i32, %arg2: i32) -> (i32, i32) {
    %c0_i32 = arith.constant 0 : i32
    return %arg0, %arg1 : i32, i32
  }
}

</mosaic_0001>

<llo_original>
// kernel: tpu_custom_call.1
$region0: #{tpu_custom_call.1}
  #allocation0 [shape = 'u32[]', space=smem, size = 0x4, offset = 0x4, fixed_abs, tag = 'smem constant byte address 0x4 - core index']
  #allocation1 [shape = 'u32[144,128]{1,0:T(1,128)}', space=vmem, size = 0x12000, scoped, tag = 'internal scratch']
  #allocation2 [shape = 'f32[16,32]{1,0:T(8,128)}', space=vmem, size = 0x2000, scoped, tag = 'scratch operand']
  %s0 = inlined_call_operand.hbm [shape: f32[16,32], index: 0, kind: input, shape index: {}]
  %s1 = inlined_call_operand.hbm [shape: f32[32,32], index: 1, kind: input, shape index: {}]
  %s2 = inlined_call_operand.hbm [shape: f32[16,32], index: 2, kind: output, shape index: {}]
  %s3 = sld [smem:[#allocation0]]
  $region34: #{tpu_custom_call.1} parent=0
    _
  %s5 = ssub.s32 1, %s3
  %s6 = scalar_select 0, %s5, %s3
  $region1: #{tpu_custom_call.1} parent=0
    #allocation3 [shape = 'u8[8192]{0}', space=vmem, size = 0x2000, scoped, tag = 'input window, operand 0, single buffered']
    #allocation4 [shape = 's32[1]{0}', space=sflag, size = 0x4, scoped, tag = 'scoped memory for tpu_custom_call.1']
    #allocation5 [shape = 's32[1]{0}', space=sflag, size = 0x4, scoped, tag = 'scoped memory for tpu_custom_call.1']
    #allocation6 [shape = 'u8[16384]{0}', space=vmem, size = 0x4000, scoped, tag = 'input window, operand 1, single buffered']
    #allocation7 [shape = 's32[1]{0}', space=sflag, size = 0x4, scoped, tag = 'scoped memory for tpu_custom_call.1']
    #allocation8 [shape = 'u8[8192]{0}', space=vmem, size = 0x2000, scoped, tag = 'output window, operand 0, single buffered']
    %7 = vsyncpa [#allocation4], 0
    %8 = vsyncpa [#allocation7], 0
    %9 = vsyncpa [#allocation5], 0
    // Predicated region
    $region2: #{tpu_custom_call.1} parent=1 // pred_check
      _
    $region3: #{tpu_custom_call.1} parent=1 // pred_check_branch
      %11 = sbr.rel (0) target = $region5
    $region4: #{tpu_custom_call.1} parent=1 // pred_region
      %s13 = ssub.s32 256, 256
      %14 = vsyncadd [#allocation4], %s13
      %s15 = sshll.u32 [#allocation3], 4
      %s16 = int_to_ptr.vmem [resolvable:$true] %s15
      %21 = dma.hbm_to_vmem [thread:$0]  %s0, 256, %s16, [#allocation4], 128, 128, 8
    $region5: #{tpu_custom_call.1} parent=1 // pred_fallthru
      _
    // Predicated region
    $region6: #{tpu_custom_call.1} parent=1 // pred_check
      _
    $region7: #{tpu_custom_call.1} parent=1 // pred_check_branch
      %23 = sbr.rel (0) target = $region9
    $region8: #{tpu_custom_call.1} parent=1 // pred_region
      %s25 = ssub.s32 512, 512
      %26 = vsyncadd [#allocation7], %s25
      %s27 = sshll.u32 [#allocation6], 4
      %s28 = int_to_ptr.vmem [resolvable:$true] %s27
      %33 = dma.hbm_to_vmem [thread:$0]  %s1, 512, %s28, [#allocation7], 128, 128, 8
    $region9: #{tpu_custom_call.1} parent=1 // pred_fallthru
      _
    // Predicated region
    $region10: #{tpu_custom_call.1} parent=1 // pred_check
      _
    $region11: #{tpu_custom_call.1} parent=1 // pred_check_branch
      %35 = sbr.rel (0) target = $region13
    $region12: #{tpu_custom_call.1} parent=1 // pred_region
      %36 = dma.done [#allocation4], 256
    $region13: #{tpu_custom_call.1} parent=1 // pred_fallthru
      _
    // Predicated region
    $region14: #{tpu_custom_call.1} parent=1 // pred_check
      _
    $region15: #{tpu_custom_call.1} parent=1 // pred_check_branch
      %38 = sbr.rel (0) target = $region17
    $region16: #{tpu_custom_call.1} parent=1 // pred_region
      %39 = dma.done [#allocation7], 512
    $region17: #{tpu_custom_call.1} parent=1 // pred_fallthru
      _
    %p40 = scmp.eq.s32.totalorder 0, 0
    // Predicated region
    $region18: #{tpu_custom_call.1} parent=1 // pred_check
      %p41 = pneg %p40
    $region19: #{tpu_custom_call.1} parent=1 // pred_check_branch
      %43 = sbr.rel (%p41) target = $region21
    $region20: #{tpu_custom_call.1} parent=1 // pred_region
      %vm44 = vcmask 261120
      %45 = vst.msk [vmem:[#allocation2] sm:$0xff] %vm44, 0.0
      %46 = vst.msk [vmem:[#allocation2 + $0x8] sm:$0xff] %vm44, 0.0
    $region21: #{tpu_custom_call.1} parent=1 // pred_fallthru
      _
    %v47 = vld [vmem:[#allocation2] sm:$0xff]
    %v48 = vld [vmem:[#allocation2 + $0x8] sm:$0xff]
    %v49 = vld [vmem:[#allocation3] sm:$0xff]
    %v50 = vld [vmem:[#allocation3 + $0x8] sm:$0xff]
    %v51 = vld [vmem:[#allocation6] sm:$0xff]
    %v52 = vld [vmem:[#allocation6 + $0x8] sm:$0xff]
    %v53 = vld [vmem:[#allocation6 + $0x10] sm:$0xff]
    %v54 = vld [vmem:[#allocation6 + $0x18] sm:$0xff]
    %vm55 = vcmask 261120
    %v57 = vsel %vm55, %v49, 0
    %v60 = vsel %vm55, %v50, 0
    %62 = vmatprep.subr.mxu0 0.0
    %63 = vmatpush1.msra.mxu0 0.0
    %64 = vmatprep.subr.mxu0 0.0
    %65 = vmatpush1.msra.mxu0 0.0
    %66 = vmatprep.subr.mxu0 0.0
    %67 = vmatpush1.msra.mxu0 0.0
    %68 = vmatprep.subr.mxu0 0.0
    %69 = vmatpush1.msra.mxu0 0.0
    %70 = vmatprep.subr.mxu0 0.0
    %71 = vmatpush1.msra.mxu0 0.0
    %72 = vmatprep.subr.mxu0 0.0
    %73 = vmatpush1.msra.mxu0 0.0
    %74 = vmatprep.subr.mxu0 0.0
    %75 = vmatpush1.msra.mxu0 0.0
    %76 = vmatprep.subr.mxu0 0.0
    %77 = vmatpush1.msra.mxu0 0.0
    %78 = vmatprep.subr.mxu0 0.0
    %79 = vmatpush1.msra.mxu0 0.0
    %80 = vmatprep.subr.mxu0 0.0
    %81 = vmatpush1.msra.mxu0 0.0
    %82 = vmatprep.subr.mxu0 0.0
    %83 = vmatpush1.msra.mxu0 0.0
    %84 = vmatprep.subr.mxu0 0.0
    %85 = vmatpush1.msra.mxu0 0.0
    %86 = vmatprep.subr.mxu0 0.0
    %87 = vmatpush1.msra.mxu0 %v54
    %88 = vmatprep.subr.mxu0 0.0
    %89 = vmatpush1.msra.mxu0 %v53
    %90 = vmatprep.subr.mxu0 0.0
    %91 = vmatpush1.msra.mxu0 %v52
    %92 = vmatprep.subr.mxu0 0.0
    %93 = vmatpush1.msra.mxu0 %v51
    %94 = vmatprep.subr.mxu0 0.0
    %95 = vmatpush2.msra.mxu0 0.0
    %96 = vmatprep.subr.mxu0 0.0
    %97 = vmatpush2.msra.mxu0 0.0
    %98 = vmatprep.subr.mxu0 0.0
    %99 = vmatpush2.msra.mxu0 0.0
    %100 = vmatprep.subr.mxu0 0.0
    %101 = vmatpush2.msra.mxu0 0.0
    %102 = vmatprep.subr.mxu0 0.0
    %103 = vmatpush2.msra.mxu0 0.0
    %104 = vmatprep.subr.mxu0 0.0
    %105 = vmatpush2.msra.mxu0 0.0
    %106 = vmatprep.subr.mxu0 0.0
    %107 = vmatpush2.msra.mxu0 0.0
    %108 = vmatprep.subr.mxu0 0.0
    %109 = vmatpush2.msra.mxu0 0.0
    %110 = vmatprep.subr.mxu0 0.0
    %111 = vmatpush2.msra.mxu0 0.0
    %112 = vmatprep.subr.mxu0 0.0
    %113 = vmatpush2.msra.mxu0 0.0
    %114 = vmatprep.subr.mxu0 0.0
    %115 = vmatpush2.msra.mxu0 0.0
    %116 = vmatprep.subr.mxu0 0.0
    %117 = vmatpush2.msra.mxu0 0.0
    %118 = vmatprep.subr.mxu0 0.0
    %119 = vmatpush2.msra.mxu0 0.0
    %120 = vmatprep.subr.mxu0 0.0
    %121 = vmatpush2.msra.mxu0 0.0
    %122 = vmatprep.subr.mxu0 0.0
    %123 = vmatpush2.msra.mxu0 0.0
    %124 = vmatprep.subr.mxu0 0.0
    %125 = vmatpush2.msra.mxu0 0.0
    %126 = vmatprep.mubr.f32.mxu0 0.0
    %127 = vmatmul.mubr.f32.gmra.mxu0 %v57
    %v128 = vpop.f32.mrf.mxu0
    %v129 = vadd.f32 0.0, %v128
    %v130 = vpop.f32.mrf.mxu0
    %131 = vmatprep.mubr.f32.mxu0 0.0
    %132 = vmatmul.mubr.f32.gmra.mxu0 %v60
    %v133 = vpop.f32.mrf.mxu0
    %v134 = vadd.f32 0.0, %v133
    %v135 = vpop.f32.mrf.mxu0
    %136 = vdwg.mxu0
    %v137 = vadd.f32 %v47, %v129
    %v138 = vadd.f32 %v48, %v134
    %139 = vst.msk [vmem:[#allocation2] sm:$0xff] %vm55, %v137
    %140 = vst.msk [vmem:[#allocation2 + $0x8] sm:$0xff] %vm55, %v138
    // Predicated region
    $region22: #{tpu_custom_call.1} parent=1 // pred_check
      %p141 = pneg %p40
    $region23: #{tpu_custom_call.1} parent=1 // pred_check_branch
      %143 = sbr.rel (%p141) target = $region25
    $region24: #{tpu_custom_call.1} parent=1 // pred_region
      %v144 = vld [vmem:[#allocation2] sm:$0xff]
      %v145 = vld [vmem:[#allocation2 + $0x8] sm:$0xff]
      %146 = vst.msk [vmem:[#allocation8] sm:$0xff] %vm55, %v144
      %147 = vst.msk [vmem:[#allocation8 + $0x8] sm:$0xff] %vm55, %v145
    $region25: #{tpu_custom_call.1} parent=1 // pred_fallthru
      _
    // Predicated region
    $region26: #{tpu_custom_call.1} parent=1 // pred_check
      _
    $region27: #{tpu_custom_call.1} parent=1 // pred_check_branch
      %149 = sbr.rel (0) target = $region29
    $region28: #{tpu_custom_call.1} parent=1 // pred_region
      %s151 = ssub.s32 256, 256
      %152 = vsyncadd [#allocation5], %s151
      %s153 = sshll.u32 [#allocation8], 4
      %s154 = int_to_ptr.vmem [resolvable:$true] %s153
      %159 = dma.vmem_to_hbm [thread:$0]  %s154, 256, %s2, [#allocation5], 128, 128, 8
    $region29: #{tpu_custom_call.1} parent=1 // pred_fallthru
      _
    // Predicated region
    $region30: #{tpu_custom_call.1} parent=1 // pred_check
      _
    $region31: #{tpu_custom_call.1} parent=1 // pred_check_branch
      %161 = sbr.rel (0) target = $region33
    $region32: #{tpu_custom_call.1} parent=1 // pred_region
      %162 = dma.done [#allocation5], 256
    $region33: #{tpu_custom_call.1} parent=1 // pred_fallthru
      _
    %163 = vsyncpa [#allocation4], 1
    %164 = vsyncpa [#allocation7], 1
    %165 = vsyncpa [#allocation5], 1

</llo_original>
